<compile_context>
chip_gen: v7x
topology: tpu7x:2x2x1
jax: 0.10.0
libtpu: 0.0.40
codegen_flags: <defaults>
</compile_context>

<pallas_src>
import functools

import jax
import jax.numpy as jnp
from jax import lax
from jax.experimental import pallas as pl
from jax.experimental.pallas import tpu as pltpu


def _round_up(x, m):
    return (x + m - 1) // m * m


def _scatter_kernel(tile_ref, local_ref, feat_ref, out_ref, *,
                    chunk, tile_rows, unroll):
    """Scatter one chunk of pre-sorted voxel rows into the current row-tile.

    tile_ref : SMEM prefetch, (num_chunks,) int32 -- output tile of each chunk
    local_ref: SMEM prefetch, (num_chunks*chunk,) int32 -- row within the tile
               (== tile_rows for padded slots -> skipped)
    feat_ref : VMEM block (chunk, C_pad) voxel features of this chunk
    out_ref  : VMEM block (tile_rows, C_pad); stays resident while the
               data-dependent output block index is unchanged
    """
    m = pl.program_id(0)

    # First chunk of a tile zero-initialises that tile (covers empty tiles and
    # the num_voxels == 0 case, and replaces the old full-buffer step-0 memset).
    prev_tile = tile_ref[jnp.maximum(m - 1, 0)]
    is_first = jnp.logical_or(m == 0, tile_ref[m] != prev_tile)

    @pl.when(is_first)
    def _():
        out_ref[...] = jnp.zeros_like(out_ref)

    # Hoisted, alignment-hinted base into the SMEM index array.
    base = pl.multiple_of(m * chunk, chunk)

    def body(g, carry):
        off = g * unroll
        for u in range(unroll):                 # short static unroll (<= 8)
            r = local_ref[base + off + u]

            @pl.when(r < tile_rows)             # padded slots target tile_rows
            def _():
                out_ref[pl.ds(r, 1), :] = feat_ref[pl.ds(off + u, 1), :]
        return carry

    lax.fori_loop(0, chunk // unroll, body, 0)


def sparse_to_bev(voxel_features, voxel_coords, batch_size, D, H, W, *,
                  chunk=256, row_tile=4096, unroll=8):
    """Equivalent of encoded_spconv_tensor.dense().view(N, C*D, H, W).

    voxel_features: (num_voxels, C) float
    voxel_coords  : (num_voxels, 4) int, columns = (batch, z, y, x)
    returns       : (batch_size, C*D, H, W)
    """
    num_voxels, C = voxel_features.shape
    num_rows = batch_size * D * H * W

    assert chunk % 8 == 0 and chunk % unroll == 0
    # Row tile: multiple of 8 sublanes, no larger than the (padded) row count.
    row_tile = max(8, min(_round_up(row_tile, 8), _round_up(num_rows, 8)))
    num_tiles = pl.cdiv(num_rows, row_tile)
    num_rows_alloc = num_tiles * row_tile
    # Lane-dense channel dim (C=128 in real pcdet configs; padded for small C).
    C_pad = _round_up(C, 128)

    # ---- wrapper-side prep: sort voxels by destination row -----------------
    coords = voxel_coords.astype(jnp.int32)
    b, z, y, x = coords[:, 0], coords[:, 1], coords[:, 2], coords[:, 3]
    row_idx = ((b * D + z) * H + y) * W + x                        # (V,)

    order = jnp.argsort(row_idx)
    rows_s = row_idx[order]
    feats_s = voxel_features[order]
    if C_pad != C:
        feats_s = jnp.pad(feats_s, ((0, 0), (0, C_pad - C)))

    tile_of_voxel = rows_s // row_tile                             # nondecreasing
    local_of_voxel = rows_s - tile_of_voxel * row_tile

    # Per-tile voxel counts -> per-tile chunk counts (>= 1 so every tile is
    # visited and zeroed even when it holds no voxels).
    counts = jnp.zeros((num_tiles,), jnp.int32).at[tile_of_voxel].add(1)
    chunks_per_tile = jnp.maximum((counts + chunk - 1) // chunk, 1)
    chunk_end = jnp.cumsum(chunks_per_tile)
    chunk_start = chunk_end - chunks_per_tile
    voxel_start = jnp.cumsum(counts) - counts

    # Static grid bound: sum_t max(ceil(c_t/chunk), 1) <= V//chunk + num_tiles.
    num_chunks = num_voxels // chunk + num_tiles
    num_slots = num_chunks * chunk

    # Place each sorted voxel in its tile's chunk-padded slot range.
    within = jnp.arange(num_voxels, dtype=jnp.int32) - voxel_start[tile_of_voxel]
    slot = chunk_start[tile_of_voxel] * chunk + within

    feats_p = jnp.zeros((num_slots, C_pad),
                        voxel_features.dtype).at[slot].set(feats_s)
    # Padded slots point one past the tile -> skipped by the kernel guard.
    local_p = jnp.full((num_slots,), row_tile, jnp.int32).at[slot].set(local_of_voxel)

    # Output tile owning each chunk (overflow chunks stick to the last tile,
    # carry only padded slots, and never re-trigger the tile zero-init).
    chunk_ids = jnp.arange(num_chunks, dtype=jnp.int32)
    tile_of_chunk = jnp.minimum(
        jnp.searchsorted(chunk_end, chunk_ids, side="right"),
        num_tiles - 1).astype(jnp.int32)

    grid_spec = pltpu.PrefetchScalarGridSpec(
        num_scalar_prefetch=2,
        grid=(num_chunks,),
        in_specs=[
            pl.BlockSpec((chunk, C_pad), lambda m, tile_ref, local_ref: (m, 0)),
        ],
        # Only one row-tile is VMEM-resident; the block index is data-dependent
        # (sorted voxels -> nondecreasing, so each tile is visited exactly once
        # and stays resident across its consecutive chunks).
        out_specs=pl.BlockSpec((row_tile, C_pad),
                               lambda m, tile_ref, local_ref: (tile_ref[m], 0)),
    )

    dense_rows = pl.pallas_call(
        functools.partial(_scatter_kernel, chunk=chunk, tile_rows=row_tile,
                          unroll=unroll),
        out_shape=jax.ShapeDtypeStruct((num_rows_alloc, C_pad),
                                       voxel_features.dtype),
        grid_spec=grid_spec,
        compiler_params=pltpu.CompilerParams(
            dimension_semantics=("arbitrary",)),
    )(tile_of_chunk, local_p, feats_p)

    # Glue: (rows, C) scatter layout -> PyTorch view(N, C*D, H, W).
    # TODO(synk): downstream TPU BEV backbones prefer channels-last; returning
    # dense_rows.reshape(N, D, H, W, C) directly would avoid this HBM transpose.
    dense = dense_rows[:num_rows, :C].reshape(batch_size, D, H, W, C)
    dense = jnp.transpose(dense, (0, 4, 1, 2, 3))                  # (N,C,D,H,W)
    return dense.reshape(batch_size, C * D, H, W)                  # (N,C*D,H,W)


class HeightCompression:
    """JAX mirror of pcdet's HeightCompression module."""

    def __init__(self, model_cfg, **kwargs):
        self.model_cfg = model_cfg
        self.num_bev_features = model_cfg["NUM_BEV_FEATURES"]

    def __call__(self, batch_dict):
        feats, coords, spatial_shape, batch_size = batch_dict["encoded_spconv_tensor"]
        D, H, W = spatial_shape
        spatial_features = sparse_to_bev(feats, coords, batch_size, D, H, W)
        assert spatial_features.shape[1] == self.num_bev_features
        batch_dict["spatial_features"] = spatial_features
        batch_dict["spatial_features_stride"] = batch_dict["encoded_spconv_tensor_stride"]
        return batch_dict


if __name__ == "__main__":
    key = jax.random.PRNGKey(0)

    # Small synthetic shapes: N=2, C=8 channels, D=2 height bins, H=W=16.
    N, C, D, H, W = 2, 8, 2, 16, 16
    num_bev_features = C * D
    num_voxels = 40  # deliberately not a multiple of the chunk size

    k1, k2 = jax.random.split(key)
    total_cells = N * D * H * W
    flat = jax.random.choice(k1, total_cells, shape=(num_voxels,), replace=False)
    b, rem = jnp.divmod(flat, D * H * W)
    z, rem2 = jnp.divmod(rem, H * W)
    y, x = jnp.divmod(rem2, W)
    voxel_coords = jnp.stack([b, z, y, x], axis=1).astype(jnp.int32)
    voxel_features = jax.random.normal(k2, (num_voxels, C), dtype=jnp.float32)

    # Pure-JAX reference of spconv .dense() + view(N, C*D, H, W).
    dense_ref = jnp.zeros((N, C, D, H, W), jnp.float32)
    dense_ref = dense_ref.at[
        voxel_coords[:, 0], :, voxel_coords[:, 1], voxel_coords[:, 2], voxel_coords[:, 3]
    ].set(voxel_features)
    expected = dense_ref.reshape(N, C * D, H, W)

    # 1) Module path (default chunk / row_tile -> single resident row-tile here).
    module = HeightCompression({"NUM_BEV_FEATURES": num_bev_features})
    batch_dict = {
        "encoded_spconv_tensor": (voxel_features, voxel_coords, (D, H, W), N),
        "encoded_spconv_tensor_stride": 8,
    }
    batch_dict = module(batch_dict)
    out = jax.block_until_ready(batch_dict["spatial_features"])
    assert out.shape == (N, num_bev_features, H, W)
    assert out.dtype == expected.dtype
    assert jnp.allclose(out, expected), "module path mismatch vs reference"
    assert batch_dict["spatial_features_stride"] == 8

    # 2) Multi-tile / multi-chunk path (exercises tile switching, per-tile
    #    zero-init, chunk padding and the per-voxel bounds guard).
    out_tiled = jax.block_until_ready(
        sparse_to_bev(voxel_features, voxel_coords, N, D, H, W,
                      chunk=8, row_tile=256, unroll=4))
    assert jnp.allclose(out_tiled, expected), "tiled path mismatch vs reference"

    # 3) Empty input: .dense() of an empty sparse tensor is all zeros.
    out_empty = jax.block_until_ready(
        sparse_to_bev(jnp.zeros((0, C), jnp.float32),
                      jnp.zeros((0, 4), jnp.int32), N, D, H, W,
                      chunk=8, row_tile=256, unroll=4))
    assert out_empty.shape == (N, num_bev_features, H, W)
    assert jnp.all(out_empty == 0.0), "empty-input path must be all zeros"

    print("KERNEL_OK")
</pallas_src>

<mosaic_0001>
module attributes {stable_mosaic.version = 11 : i64} {
  func.func @_scatter_kernel(%arg0: i32, %arg1: memref<1xi32, #tpu.memory_space<smem>>, %arg2: memref<256xi32, #tpu.memory_space<smem>>, %arg3: memref<256x128xf32, #tpu.memory_space<vmem>>, %arg4: memref<1024x128xf32, #tpu.memory_space<vmem>>) attributes {dimension_semantics = [#tpu.dimension_semantics<arbitrary>], iteration_bounds = array<i64: 1>, scalar_prefetch = 2 : i64, scratch_operands = 0 : i64, tpu.core_type = #tpu.core_type<tc>, window_params = [{transform_indices = @transform_0, window_bounds = array<i64: 256, 128>}, {transform_indices = @transform_1, window_bounds = array<i64: 1024, 128>}]} {
    %c1_i32 = arith.constant 1 : i32
    %0 = arith.subi %arg0, %c1_i32 : i32
    %c0_i32 = arith.constant 0 : i32
    %1 = arith.maxsi %0, %c0_i32 : i32
    %2 = arith.index_cast %1 : i32 to index
    %3 = memref.load %arg1[%2] : memref<1xi32, #tpu.memory_space<smem>>
    %c0_i32_0 = arith.constant 0 : i32
    %4 = arith.cmpi eq, %arg0, %c0_i32_0 : i32
    %5 = arith.index_cast %arg0 : i32 to index
    %6 = memref.load %arg1[%5] : memref<1xi32, #tpu.memory_space<smem>>
    %7 = arith.cmpi ne, %6, %3 : i32
    %8 = arith.ori %4, %7 : i1
    %9 = arith.extui %8 : i1 to i32
    %c0_i32_1 = arith.constant 0 : i32
    %10 = arith.cmpi ne, %9, %c0_i32_1 : i32
    scf.if %10 {
      %cst = arith.constant 0.000000e+00 : f32
      %14 = vector.broadcast %cst : f32 to vector<1024x128xf32>
      %c0 = arith.constant 0 : index
      %c0_5 = arith.constant 0 : index
      %15 = vector.load %arg4[%c0, %c0_5] : memref<1024x128xf32, #tpu.memory_space<vmem>>, vector<1024x128xf32>
      tpu.vector_store %arg4[%c0, %c0_5], %14 {strides = array<i32>} : memref<1024x128xf32, #tpu.memory_space<vmem>>, vector<1024x128xf32>,
    } else {
    }
    %c256_i32 = arith.constant 256 : i32
    %11 = arith.muli %arg0, %c256_i32 : i32
    %12 = tpu.assume_multiple %11, 256 : i32
    %c0_i32_2 = arith.constant 0 : i32
    %c32_i32 = arith.constant 32 : i32
    %13 = arith.addi %c0_i32_2, %c32_i32 : i32
    %c1_i32_3 = arith.constant 1 : i32
    scf.for %arg5 = %c0_i32_2 to %13 step %c1_i32_3  : i32 {
      %c8_i32 = arith.constant 8 : i32
      %14 = arith.muli %arg5, %c8_i32 : i32
      %15 = arith.addi %12, %14 : i32
      %c0_i32_5 = arith.constant 0 : i32
      %16 = arith.addi %15, %c0_i32_5 : i32
      %17 = arith.index_cast %16 : i32 to index
      %18 = memref.load %arg2[%17] : memref<256xi32, #tpu.memory_space<smem>>
      %c1024_i32 = arith.constant 1024 : i32
      %19 = arith.cmpi slt, %18, %c1024_i32 : i32
      %20 = arith.extui %19 : i1 to i32
      %c0_i32_6 = arith.constant 0 : i32
      %21 = arith.cmpi ne, %20, %c0_i32_6 : i32
      scf.if %21 {
        %c0_i32_22 = arith.constant 0 : i32
        %71 = arith.addi %14, %c0_i32_22 : i32
        %72 = arith.index_cast %71 : i32 to index
        %c0 = arith.constant 0 : index
        %73 = vector.load %arg3[%72, %c0] : memref<256x128xf32, #tpu.memory_space<vmem>>, vector<1x128xf32>
        %74 = arith.index_cast %18 : i32 to index
        %c0_23 = arith.constant 0 : index
        %75 = vector.load %arg4[%74, %c0_23] : memref<1024x128xf32, #tpu.memory_space<vmem>>, vector<1x128xf32>
        tpu.vector_store %arg4[%74, %c0_23], %73 {strides = array<i32>} : memref<1024x128xf32, #tpu.memory_space<vmem>>, vector<1x128xf32>,
      } else {
      }
      %22 = arith.addi %12, %14 : i32
      %c1_i32_7 = arith.constant 1 : i32
      %23 = arith.addi %22, %c1_i32_7 : i32
      %24 = arith.index_cast %23 : i32 to index
      %25 = memref.load %arg2[%24] : memref<256xi32, #tpu.memory_space<smem>>
      %c1024_i32_8 = arith.constant 1024 : i32
      %26 = arith.cmpi slt, %25, %c1024_i32_8 : i32
      %27 = arith.extui %26 : i1 to i32
      %c0_i32_9 = arith.constant 0 : i32
      %28 = arith.cmpi ne, %27, %c0_i32_9 : i32
      scf.if %28 {
        %c1_i32_22 = arith.constant 1 : i32
        %71 = arith.addi %14, %c1_i32_22 : i32
        %72 = arith.index_cast %71 : i32 to index
        %c0 = arith.constant 0 : index
        %73 = vector.load %arg3[%72, %c0] : memref<256x128xf32, #tpu.memory_space<vmem>>, vector<1x128xf32>
        %74 = arith.index_cast %25 : i32 to index
        %c0_23 = arith.constant 0 : index
        %75 = vector.load %arg4[%74, %c0_23] : memref<1024x128xf32, #tpu.memory_space<vmem>>, vector<1x128xf32>
        tpu.vector_store %arg4[%74, %c0_23], %73 {strides = array<i32>} : memref<1024x128xf32, #tpu.memory_space<vmem>>, vector<1x128xf32>,
      } else {
      }
      %29 = arith.addi %12, %14 : i32
      %c2_i32 = arith.constant 2 : i32
      %30 = arith.addi %29, %c2_i32 : i32
      %31 = arith.index_cast %30 : i32 to index
      %32 = memref.load %arg2[%31] : memref<256xi32, #tpu.memory_space<smem>>
      %c1024_i32_10 = arith.constant 1024 : i32
      %33 = arith.cmpi slt, %32, %c1024_i32_10 : i32
      %34 = arith.extui %33 : i1 to i32
      %c0_i32_11 = arith.constant 0 : i32
      %35 = arith.cmpi ne, %34, %c0_i32_11 : i32
      scf.if %35 {
        %c2_i32_22 = arith.constant 2 : i32
        %71 = arith.addi %14, %c2_i32_22 : i32
        %72 = arith.index_cast %71 : i32 to index
        %c0 = arith.constant 0 : index
        %73 = vector.load %arg3[%72, %c0] : memref<256x128xf32, #tpu.memory_space<vmem>>, vector<1x128xf32>
        %74 = arith.index_cast %32 : i32 to index
        %c0_23 = arith.constant 0 : index
        %75 = vector.load %arg4[%74, %c0_23] : memref<1024x128xf32, #tpu.memory_space<vmem>>, vector<1x128xf32>
        tpu.vector_store %arg4[%74, %c0_23], %73 {strides = array<i32>} : memref<1024x128xf32, #tpu.memory_space<vmem>>, vector<1x128xf32>,
      } else {
      }
      %36 = arith.addi %12, %14 : i32
      %c3_i32 = arith.constant 3 : i32
      %37 = arith.addi %36, %c3_i32 : i32
      %38 = arith.index_cast %37 : i32 to index
      %39 = memref.load %arg2[%38] : memref<256xi32, #tpu.memory_space<smem>>
      %c1024_i32_12 = arith.constant 1024 : i32
      %40 = arith.cmpi slt, %39, %c1024_i32_12 : i32
      %41 = arith.extui %40 : i1 to i32
      %c0_i32_13 = arith.constant 0 : i32
      %42 = arith.cmpi ne, %41, %c0_i32_13 : i32
      scf.if %42 {
        %c3_i32_22 = arith.constant 3 : i32
        %71 = arith.addi %14, %c3_i32_22 : i32
        %72 = arith.index_cast %71 : i32 to index
        %c0 = arith.constant 0 : index
        %73 = vector.load %arg3[%72, %c0] : memref<256x128xf32, #tpu.memory_space<vmem>>, vector<1x128xf32>
        %74 = arith.index_cast %39 : i32 to index
        %c0_23 = arith.constant 0 : index
        %75 = vector.load %arg4[%74, %c0_23] : memref<1024x128xf32, #tpu.memory_space<vmem>>, vector<1x128xf32>
        tpu.vector_store %arg4[%74, %c0_23], %73 {strides = array<i32>} : memref<1024x128xf32, #tpu.memory_space<vmem>>, vector<1x128xf32>,
      } else {
      }
      %43 = arith.addi %12, %14 : i32
      %c4_i32 = arith.constant 4 : i32
      %44 = arith.addi %43, %c4_i32 : i32
      %45 = arith.index_cast %44 : i32 to index
      %46 = memref.load %arg2[%45] : memref<256xi32, #tpu.memory_space<smem>>
      %c1024_i32_14 = arith.constant 1024 : i32
      %47 = arith.cmpi slt, %46, %c1024_i32_14 : i32
      %48 = arith.extui %47 : i1 to i32
      %c0_i32_15 = arith.constant 0 : i32
      %49 = arith.cmpi ne, %48, %c0_i32_15 : i32
      scf.if %49 {
        %c4_i32_22 = arith.constant 4 : i32
        %71 = arith.addi %14, %c4_i32_22 : i32
        %72 = arith.index_cast %71 : i32 to index
        %c0 = arith.constant 0 : index
        %73 = vector.load %arg3[%72, %c0] : memref<256x128xf32, #tpu.memory_space<vmem>>, vector<1x128xf32>
        %74 = arith.index_cast %46 : i32 to index
        %c0_23 = arith.constant 0 : index
        %75 = vector.load %arg4[%74, %c0_23] : memref<1024x128xf32, #tpu.memory_space<vmem>>, vector<1x128xf32>
        tpu.vector_store %arg4[%74, %c0_23], %73 {strides = array<i32>} : memref<1024x128xf32, #tpu.memory_space<vmem>>, vector<1x128xf32>,
      } else {
      }
      %50 = arith.addi %12, %14 : i32
      %c5_i32 = arith.constant 5 : i32
      %51 = arith.addi %50, %c5_i32 : i32
      %52 = arith.index_cast %51 : i32 to index
      %53 = memref.load %arg2[%52] : memref<256xi32, #tpu.memory_space<smem>>
      %c1024_i32_16 = arith.constant 1024 : i32
      %54 = arith.cmpi slt, %53, %c1024_i32_16 : i32
      %55 = arith.extui %54 : i1 to i32
      %c0_i32_17 = arith.constant 0 : i32
      %56 = arith.cmpi ne, %55, %c0_i32_17 : i32
      scf.if %56 {
        %c5_i32_22 = arith.constant 5 : i32
        %71 = arith.addi %14, %c5_i32_22 : i32
        %72 = arith.index_cast %71 : i32 to index
        %c0 = arith.constant 0 : index
        %73 = vector.load %arg3[%72, %c0] : memref<256x128xf32, #tpu.memory_space<vmem>>, vector<1x128xf32>
        %74 = arith.index_cast %53 : i32 to index
        %c0_23 = arith.constant 0 : index
        %75 = vector.load %arg4[%74, %c0_23] : memref<1024x128xf32, #tpu.memory_space<vmem>>, vector<1x128xf32>
        tpu.vector_store %arg4[%74, %c0_23], %73 {strides = array<i32>} : memref<1024x128xf32, #tpu.memory_space<vmem>>, vector<1x128xf32>,
      } else {
      }
      %57 = arith.addi %12, %14 : i32
      %c6_i32 = arith.constant 6 : i32
      %58 = arith.addi %57, %c6_i32 : i32
      %59 = arith.index_cast %58 : i32 to index
      %60 = memref.load %arg2[%59] : memref<256xi32, #tpu.memory_space<smem>>
      %c1024_i32_18 = arith.constant 1024 : i32
      %61 = arith.cmpi slt, %60, %c1024_i32_18 : i32
      %62 = arith.extui %61 : i1 to i32
      %c0_i32_19 = arith.constant 0 : i32
      %63 = arith.cmpi ne, %62, %c0_i32_19 : i32
      scf.if %63 {
        %c6_i32_22 = arith.constant 6 : i32
        %71 = arith.addi %14, %c6_i32_22 : i32
        %72 = arith.index_cast %71 : i32 to index
        %c0 = arith.constant 0 : index
        %73 = vector.load %arg3[%72, %c0] : memref<256x128xf32, #tpu.memory_space<vmem>>, vector<1x128xf32>
        %74 = arith.index_cast %60 : i32 to index
        %c0_23 = arith.constant 0 : index
        %75 = vector.load %arg4[%74, %c0_23] : memref<1024x128xf32, #tpu.memory_space<vmem>>, vector<1x128xf32>
        tpu.vector_store %arg4[%74, %c0_23], %73 {strides = array<i32>} : memref<1024x128xf32, #tpu.memory_space<vmem>>, vector<1x128xf32>,
      } else {
      }
      %64 = arith.addi %12, %14 : i32
      %c7_i32 = arith.constant 7 : i32
      %65 = arith.addi %64, %c7_i32 : i32
      %66 = arith.index_cast %65 : i32 to index
      %67 = memref.load %arg2[%66] : memref<256xi32, #tpu.memory_space<smem>>
      %c1024_i32_20 = arith.constant 1024 : i32
      %68 = arith.cmpi slt, %67, %c1024_i32_20 : i32
      %69 = arith.extui %68 : i1 to i32
      %c0_i32_21 = arith.constant 0 : i32
      %70 = arith.cmpi ne, %69, %c0_i32_21 : i32
      scf.if %70 {
        %c7_i32_22 = arith.constant 7 : i32
        %71 = arith.addi %14, %c7_i32_22 : i32
        %72 = arith.index_cast %71 : i32 to index
        %c0 = arith.constant 0 : index
        %73 = vector.load %arg3[%72, %c0] : memref<256x128xf32, #tpu.memory_space<vmem>>, vector<1x128xf32>
        %74 = arith.index_cast %67 : i32 to index
        %c0_23 = arith.constant 0 : index
        %75 = vector.load %arg4[%74, %c0_23] : memref<1024x128xf32, #tpu.memory_space<vmem>>, vector<1x128xf32>
        tpu.vector_store %arg4[%74, %c0_23], %73 {strides = array<i32>} : memref<1024x128xf32, #tpu.memory_space<vmem>>, vector<1x128xf32>,
      } else {
      }
    }
    %c32_i32_4 = arith.constant 32 : i32
    return
  }
  func.func @transform_0(%arg0: i32, %arg1: memref<1xi32, #tpu.memory_space<smem>>, %arg2: memref<256xi32, #tpu.memory_space<smem>>) -> (i32, i32) {
    %c0_i32 = arith.constant 0 : i32
    %c0_i32_0 = arith.constant 0 : i32
    return %arg0, %c0_i32 : i32, i32
  }
  func.func @transform_1(%arg0: i32, %arg1: memref<1xi32, #tpu.memory_space<smem>>, %arg2: memref<256xi32, #tpu.memory_space<smem>>) -> (i32, i32) {
    %0 = arith.index_cast %arg0 : i32 to index
    %1 = memref.load %arg1[%0] : memref<1xi32, #tpu.memory_space<smem>>
    %c0_i32 = arith.constant 0 : i32
    %c0_i32_0 = arith.constant 0 : i32
    return %1, %c0_i32 : i32, i32
  }
}

</mosaic_0001>

<llo_original>
// kernel: tpu_custom_call.1
$region0: #{tpu_custom_call.1}
  #allocation0 [shape = 'u32[]', space=smem, size = 0x4, offset = 0x4, fixed_abs, tag = 'smem constant byte address 0x4 - core index']
  #allocation1 [shape = 'u32[144,128]{1,0:T(1,128)}', space=vmem, size = 0x12000, scoped, tag = 'internal scratch']
  #allocation2 [shape = 's32[1]{0}', space=sflag, size = 0x4, scoped, tag = 'scoped memory for tpu_custom_call.1']
  #allocation3 [shape = 's32[1]{0:T(128)S(6)}', space=smem, size = 0x200, scoped, tag = 'prefetched SMEM operand 0']
  #allocation4 [shape = 'u8[1024]{0}', space=smem, size = 0x400, scoped, tag = 'prefetched SMEM operand 1']
  %s0 = inlined_call_operand.<no memory space> [shape: s32[1], index: 0, kind: input, shape index: {}]
  %s1 = inlined_call_operand.vmem [shape: s32[256], index: 1, kind: input, shape index: {}]
  %s2 = inlined_call_operand.hbm [shape: f32[256,128], index: 2, kind: input, shape index: {}]
  %s3 = inlined_call_operand.hbm [shape: f32[1024,128], index: 3, kind: output, shape index: {}]
  %s4 = sld [smem:[#allocation0]]
  $region61: #{tpu_custom_call.1} parent=0
    _
  %s6 = ssub.s32 1, %s4
  %s7 = scalar_select 0, %s6, %s4
  %8 = sst [smem:[#allocation3]] %s0
  %s9 = sshll.u32 %s1, 4
  %s10 = int_to_ptr.vmem [resolvable:$true] %s9
  %12 = dma.vmem_to_smem %s10, 32, [#allocation4], [#allocation2]
  %13 = dma.done [#allocation2], 32
  %14 = sfence
  $region1: #{tpu_custom_call.1} parent=0
    #allocation5 [shape = 'u8[131072]{0}', space=vmem, size = 0x20000, scoped, tag = 'input window, operand 2, single buffered']
    #allocation6 [shape = 's32[1]{0}', space=sflag, size = 0x4, scoped, tag = 'scoped memory for tpu_custom_call.1']
    #allocation7 [shape = 's32[1]{0}', space=sflag, size = 0x4, scoped, tag = 'scoped memory for tpu_custom_call.1']
    #allocation8 [shape = 'u8[524288]{0}', space=vmem, size = 0x80000, scoped, tag = 'output window, operand 0, single buffered']
    %15 = vsyncpa [#allocation6], 0
    %16 = vsyncpa [#allocation7], 0
    // Predicated region
    $region2: #{tpu_custom_call.1} parent=1 // pred_check
      _
    $region3: #{tpu_custom_call.1} parent=1 // pred_check_branch
      %18 = sbr.rel (0) target = $region5
    $region4: #{tpu_custom_call.1} parent=1 // pred_region
      %s20 = ssub.s32 4096, 4096
      %21 = vsyncadd [#allocation6], %s20
      %s22 = sshll.u32 [#allocation5], 4
      %s23 = int_to_ptr.vmem [resolvable:$true] %s22
      %28 = dma.hbm_to_vmem [thread:$0]  %s2, 4096, %s23, [#allocation6], 128, 128, 8
    $region5: #{tpu_custom_call.1} parent=1 // pred_fallthru
      _
    // Predicated region
    $region6: #{tpu_custom_call.1} parent=1 // pred_check
      _
    $region7: #{tpu_custom_call.1} parent=1 // pred_check_branch
      %30 = sbr.rel (0) target = $region9
    $region8: #{tpu_custom_call.1} parent=1 // pred_region
      %31 = dma.done [#allocation6], 4096
    $region9: #{tpu_custom_call.1} parent=1 // pred_fallthru
      _
    %s32 = sld [smem:[#allocation3]]
    %s33 = smul.u32 128, %s32
    %s34 = ssub.s32 0, 1
    %p35 = scmp.gt.s32.totalorder %s34, 0
    %s36 = scalar_select %p35, %s34, 0
    %s37 = sld [smem:[#allocation3 + %s36]]
    %p38 = scmp.eq.s32.totalorder 0, 0
    %s39 = sld [smem:[#allocation3]]
    %p40 = scmp.ne.s32.totalorder %s39, %s37
    %p41 = por %p38, %p40
    // Predicated region
    $region10: #{tpu_custom_call.1} parent=1 // pred_check
      %p42 = pneg %p41
    $region11: #{tpu_custom_call.1} parent=1 // pred_check_branch
      %44 = sbr.rel (%p42) target = $region13
    $region12: #{tpu_custom_call.1} parent=1 // pred_region
      %45 = vst [vmem:[#allocation8] sm:$0xff] 0.0
      %46 = vst [vmem:[#allocation8 + $0x8] sm:$0xff] 0.0
      %47 = vst [vmem:[#allocation8 + $0x10] sm:$0xff] 0.0
      %48 = vst [vmem:[#allocation8 + $0x18] sm:$0xff] 0.0
      %49 = vst [vmem:[#allocation8 + $0x20] sm:$0xff] 0.0
      %50 = vst [vmem:[#allocation8 + $0x28] sm:$0xff] 0.0
      %51 = vst [vmem:[#allocation8 + $0x30] sm:$0xff] 0.0
      %52 = vst [vmem:[#allocation8 + $0x38] sm:$0xff] 0.0
      %53 = vst [vmem:[#allocation8 + $0x40] sm:$0xff] 0.0
      %54 = vst [vmem:[#allocation8 + $0x48] sm:$0xff] 0.0
      %55 = vst [vmem:[#allocation8 + $0x50] sm:$0xff] 0.0
      %56 = vst [vmem:[#allocation8 + $0x58] sm:$0xff] 0.0
      %57 = vst [vmem:[#allocation8 + $0x60] sm:$0xff] 0.0
      %58 = vst [vmem:[#allocation8 + $0x68] sm:$0xff] 0.0
      %59 = vst [vmem:[#allocation8 + $0x70] sm:$0xff] 0.0
      %60 = vst [vmem:[#allocation8 + $0x78] sm:$0xff] 0.0
      %61 = vst [vmem:[#allocation8 + $0x80] sm:$0xff] 0.0
      %62 = vst [vmem:[#allocation8 + $0x88] sm:$0xff] 0.0
      %63 = vst [vmem:[#allocation8 + $0x90] sm:$0xff] 0.0
      %64 = vst [vmem:[#allocation8 + $0x98] sm:$0xff] 0.0
      %65 = vst [vmem:[#allocation8 + $0xa0] sm:$0xff] 0.0
      %66 = vst [vmem:[#allocation8 + $0xa8] sm:$0xff] 0.0
      %67 = vst [vmem:[#allocation8 + $0xb0] sm:$0xff] 0.0
      %68 = vst [vmem:[#allocation8 + $0xb8] sm:$0xff] 0.0
      %69 = vst [vmem:[#allocation8 + $0xc0] sm:$0xff] 0.0
      %70 = vst [vmem:[#allocation8 + $0xc8] sm:$0xff] 0.0
      %71 = vst [vmem:[#allocation8 + $0xd0] sm:$0xff] 0.0
      %72 = vst [vmem:[#allocation8 + $0xd8] sm:$0xff] 0.0
      %73 = vst [vmem:[#allocation8 + $0xe0] sm:$0xff] 0.0
      %74 = vst [vmem:[#allocation8 + $0xe8] sm:$0xff] 0.0
      %75 = vst [vmem:[#allocation8 + $0xf0] sm:$0xff] 0.0
      %76 = vst [vmem:[#allocation8 + $0xf8] sm:$0xff] 0.0
      %77 = vst [vmem:[#allocation8 + $0x100] sm:$0xff] 0.0
      %78 = vst [vmem:[#allocation8 + $0x108] sm:$0xff] 0.0
      %79 = vst [vmem:[#allocation8 + $0x110] sm:$0xff] 0.0
      %80 = vst [vmem:[#allocation8 + $0x118] sm:$0xff] 0.0
      %81 = vst [vmem:[#allocation8 + $0x120] sm:$0xff] 0.0
      %82 = vst [vmem:[#allocation8 + $0x128] sm:$0xff] 0.0
      %83 = vst [vmem:[#allocation8 + $0x130] sm:$0xff] 0.0
      %84 = vst [vmem:[#allocation8 + $0x138] sm:$0xff] 0.0
      %85 = vst [vmem:[#allocation8 + $0x140] sm:$0xff] 0.0
      %86 = vst [vmem:[#allocation8 + $0x148] sm:$0xff] 0.0
      %87 = vst [vmem:[#allocation8 + $0x150] sm:$0xff] 0.0
      %88 = vst [vmem:[#allocation8 + $0x158] sm:$0xff] 0.0
      %89 = vst [vmem:[#allocation8 + $0x160] sm:$0xff] 0.0
      %90 = vst [vmem:[#allocation8 + $0x168] sm:$0xff] 0.0
      %91 = vst [vmem:[#allocation8 + $0x170] sm:$0xff] 0.0
      %92 = vst [vmem:[#allocation8 + $0x178] sm:$0xff] 0.0
      %93 = vst [vmem:[#allocation8 + $0x180] sm:$0xff] 0.0
      %94 = vst [vmem:[#allocation8 + $0x188] sm:$0xff] 0.0
      %95 = vst [vmem:[#allocation8 + $0x190] sm:$0xff] 0.0
      %96 = vst [vmem:[#allocation8 + $0x198] sm:$0xff] 0.0
      %97 = vst [vmem:[#allocation8 + $0x1a0] sm:$0xff] 0.0
      %98 = vst [vmem:[#allocation8 + $0x1a8] sm:$0xff] 0.0
      %99 = vst [vmem:[#allocation8 + $0x1b0] sm:$0xff] 0.0
      %100 = vst [vmem:[#allocation8 + $0x1b8] sm:$0xff] 0.0
      %101 = vst [vmem:[#allocation8 + $0x1c0] sm:$0xff] 0.0
      %102 = vst [vmem:[#allocation8 + $0x1c8] sm:$0xff] 0.0
      %103 = vst [vmem:[#allocation8 + $0x1d0] sm:$0xff] 0.0
      %104 = vst [vmem:[#allocation8 + $0x1d8] sm:$0xff] 0.0
      %105 = vst [vmem:[#allocation8 + $0x1e0] sm:$0xff] 0.0
      %106 = vst [vmem:[#allocation8 + $0x1e8] sm:$0xff] 0.0
      %107 = vst [vmem:[#allocation8 + $0x1f0] sm:$0xff] 0.0
      %108 = vst [vmem:[#allocation8 + $0x1f8] sm:$0xff] 0.0
      %109 = vst [vmem:[#allocation8 + $0x200] sm:$0xff] 0.0
      %110 = vst [vmem:[#allocation8 + $0x208] sm:$0xff] 0.0
      %111 = vst [vmem:[#allocation8 + $0x210] sm:$0xff] 0.0
      %112 = vst [vmem:[#allocation8 + $0x218] sm:$0xff] 0.0
      %113 = vst [vmem:[#allocation8 + $0x220] sm:$0xff] 0.0
      %114 = vst [vmem:[#allocation8 + $0x228] sm:$0xff] 0.0
      %115 = vst [vmem:[#allocation8 + $0x230] sm:$0xff] 0.0
      %116 = vst [vmem:[#allocation8 + $0x238] sm:$0xff] 0.0
      %117 = vst [vmem:[#allocation8 + $0x240] sm:$0xff] 0.0
      %118 = vst [vmem:[#allocation8 + $0x248] sm:$0xff] 0.0
      %119 = vst [vmem:[#allocation8 + $0x250] sm:$0xff] 0.0
      %120 = vst [vmem:[#allocation8 + $0x258] sm:$0xff] 0.0
      %121 = vst [vmem:[#allocation8 + $0x260] sm:$0xff] 0.0
      %122 = vst [vmem:[#allocation8 + $0x268] sm:$0xff] 0.0
      %123 = vst [vmem:[#allocation8 + $0x270] sm:$0xff] 0.0
      %124 = vst [vmem:[#allocation8 + $0x278] sm:$0xff] 0.0
      %125 = vst [vmem:[#allocation8 + $0x280] sm:$0xff] 0.0
      %126 = vst [vmem:[#allocation8 + $0x288] sm:$0xff] 0.0
      %127 = vst [vmem:[#allocation8 + $0x290] sm:$0xff] 0.0
      %128 = vst [vmem:[#allocation8 + $0x298] sm:$0xff] 0.0
      %129 = vst [vmem:[#allocation8 + $0x2a0] sm:$0xff] 0.0
      %130 = vst [vmem:[#allocation8 + $0x2a8] sm:$0xff] 0.0
      %131 = vst [vmem:[#allocation8 + $0x2b0] sm:$0xff] 0.0
      %132 = vst [vmem:[#allocation8 + $0x2b8] sm:$0xff] 0.0
      %133 = vst [vmem:[#allocation8 + $0x2c0] sm:$0xff] 0.0
      %134 = vst [vmem:[#allocation8 + $0x2c8] sm:$0xff] 0.0
      %135 = vst [vmem:[#allocation8 + $0x2d0] sm:$0xff] 0.0
      %136 = vst [vmem:[#allocation8 + $0x2d8] sm:$0xff] 0.0
      %137 = vst [vmem:[#allocation8 + $0x2e0] sm:$0xff] 0.0
      %138 = vst [vmem:[#allocation8 + $0x2e8] sm:$0xff] 0.0
      %139 = vst [vmem:[#allocation8 + $0x2f0] sm:$0xff] 0.0
      %140 = vst [vmem:[#allocation8 + $0x2f8] sm:$0xff] 0.0
      %141 = vst [vmem:[#allocation8 + $0x300] sm:$0xff] 0.0
      %142 = vst [vmem:[#allocation8 + $0x308] sm:$0xff] 0.0
      %143 = vst [vmem:[#allocation8 + $0x310] sm:$0xff] 0.0
      %144 = vst [vmem:[#allocation8 + $0x318] sm:$0xff] 0.0
      %145 = vst [vmem:[#allocation8 + $0x320] sm:$0xff] 0.0
      %146 = vst [vmem:[#allocation8 + $0x328] sm:$0xff] 0.0
      %147 = vst [vmem:[#allocation8 + $0x330] sm:$0xff] 0.0
      %148 = vst [vmem:[#allocation8 + $0x338] sm:$0xff] 0.0
      %149 = vst [vmem:[#allocation8 + $0x340] sm:$0xff] 0.0
      %150 = vst [vmem:[#allocation8 + $0x348] sm:$0xff] 0.0
      %151 = vst [vmem:[#allocation8 + $0x350] sm:$0xff] 0.0
      %152 = vst [vmem:[#allocation8 + $0x358] sm:$0xff] 0.0
      %153 = vst [vmem:[#allocation8 + $0x360] sm:$0xff] 0.0
      %154 = vst [vmem:[#allocation8 + $0x368] sm:$0xff] 0.0
      %155 = vst [vmem:[#allocation8 + $0x370] sm:$0xff] 0.0
      %156 = vst [vmem:[#allocation8 + $0x378] sm:$0xff] 0.0
      %157 = vst [vmem:[#allocation8 + $0x380] sm:$0xff] 0.0
      %158 = vst [vmem:[#allocation8 + $0x388] sm:$0xff] 0.0
      %159 = vst [vmem:[#allocation8 + $0x390] sm:$0xff] 0.0
      %160 = vst [vmem:[#allocation8 + $0x398] sm:$0xff] 0.0
      %161 = vst [vmem:[#allocation8 + $0x3a0] sm:$0xff] 0.0
      %162 = vst [vmem:[#allocation8 + $0x3a8] sm:$0xff] 0.0
      %163 = vst [vmem:[#allocation8 + $0x3b0] sm:$0xff] 0.0
      %164 = vst [vmem:[#allocation8 + $0x3b8] sm:$0xff] 0.0
      %165 = vst [vmem:[#allocation8 + $0x3c0] sm:$0xff] 0.0
      %166 = vst [vmem:[#allocation8 + $0x3c8] sm:$0xff] 0.0
      %167 = vst [vmem:[#allocation8 + $0x3d0] sm:$0xff] 0.0
      %168 = vst [vmem:[#allocation8 + $0x3d8] sm:$0xff] 0.0
      %169 = vst [vmem:[#allocation8 + $0x3e0] sm:$0xff] 0.0
      %170 = vst [vmem:[#allocation8 + $0x3e8] sm:$0xff] 0.0
      %171 = vst [vmem:[#allocation8 + $0x3f0] sm:$0xff] 0.0
      %172 = vst [vmem:[#allocation8 + $0x3f8] sm:$0xff] 0.0
    $region13: #{tpu_custom_call.1} parent=1 // pred_fallthru
      _
    %s173 = smul.u32 0, 256
    loop: start=0, step=1, limit=32
    $region14: #{tpu_custom_call.1} parent=1 // loop_pre_header
      _
    $region15: #{tpu_custom_call.1} parent=1 // loop_header
      %s175 = sphi 0, %s179
      %p176 = scmp.ge.s32.totalorder %s175, 32
    $region16: #{tpu_custom_call.1} parent=1 // loop_header_branch
      %178 = sbr.rel (%p176) target = $region20
    $region17: #{tpu_custom_call.1} parent=1 // loop_body
      %s180 = smul.u32 %s175, 8
      %s181 = sadd.s32 %s173, %s180
      %s182 = sld [smem:[#allocation4 + %s181]]
      %p183 = scmp.lt.s32.totalorder %s182, 1024
      // Predicated region
      $region21: #{tpu_custom_call.1} parent=17 // pred_check
        %p184 = pneg %p183
      $region22: #{tpu_custom_call.1} parent=17 // pred_check_branch
        %186 = sbr.rel (%p184) target = $region24
      $region23: #{tpu_custom_call.1} parent=17 // pred_region
        %s187 = scalar_lea.vmem [#allocation5], %s180
        %v188 = vld [vmem:[%s187] sm:$0x1]
        %s189 = scalar_lea.vmem [#allocation8], %s182
        %190 = vst [vmem:[%s189] sm:$0x1] %v188
      $region24: #{tpu_custom_call.1} parent=17 // pred_fallthru
        _
      %s191 = sadd.s32 %s181, 1
      %s192 = sld [smem:[#allocation4 + %s191]]
      %p193 = scmp.lt.s32.totalorder %s192, 1024
      // Predicated region
      $region25: #{tpu_custom_call.1} parent=17 // pred_check
        %p194 = pneg %p193
      $region26: #{tpu_custom_call.1} parent=17 // pred_check_branch
        %196 = sbr.rel (%p194) target = $region28
      $region27: #{tpu_custom_call.1} parent=17 // pred_region
        %s197 = sadd.s32 %s180, 1
        %s198 = scalar_lea.vmem [#allocation5], %s197
        %v199 = vld [vmem:[%s198] sm:$0x1]
        %s200 = scalar_lea.vmem [#allocation8], %s192
        %201 = vst [vmem:[%s200] sm:$0x1] %v199
      $region28: #{tpu_custom_call.1} parent=17 // pred_fallthru
        _
      %s202 = sadd.s32 %s181, 2
      %s203 = sld [smem:[#allocation4 + %s202]]
      %p204 = scmp.lt.s32.totalorder %s203, 1024
      // Predicated region
      $region29: #{tpu_custom_call.1} parent=17 // pred_check
        %p205 = pneg %p204
      $region30: #{tpu_custom_call.1} parent=17 // pred_check_branch
        %207 = sbr.rel (%p205) target = $region32
      $region31: #{tpu_custom_call.1} parent=17 // pred_region
        %s208 = sadd.s32 %s180, 2
        %s209 = scalar_lea.vmem [#allocation5], %s208
        %v210 = vld [vmem:[%s209] sm:$0x1]
        %s211 = scalar_lea.vmem [#allocation8], %s203
        %212 = vst [vmem:[%s211] sm:$0x1] %v210
      $region32: #{tpu_custom_call.1} parent=17 // pred_fallthru
        _
      %s213 = sadd.s32 %s181, 3
      %s214 = sld [smem:[#allocation4 + %s213]]
      %p215 = scmp.lt.s32.totalorder %s214, 1024
      // Predicated region
      $region33: #{tpu_custom_call.1} parent=17 // pred_check
        %p216 = pneg %p215
      $region34: #{tpu_custom_call.1} parent=17 // pred_check_branch
        %218 = sbr.rel (%p216) target = $region36
      $region35: #{tpu_custom_call.1} parent=17 // pred_region
        %s219 = sadd.s32 %s180, 3
        %s220 = scalar_lea.vmem [#allocation5], %s219
        %v221 = vld [vmem:[%s220] sm:$0x1]
        %s222 = scalar_lea.vmem [#allocation8], %s214
        %223 = vst [vmem:[%s222] sm:$0x1] %v221
      $region36: #{tpu_custom_call.1} parent=17 // pred_fallthru
        _
      %s224 = sadd.s32 %s181, 4
      %s225 = sld [smem:[#allocation4 + %s224]]
      %p226 = scmp.lt.s32.totalorder %s225, 1024
      // Predicated region
      $region37: #{tpu_custom_call.1} parent=17 // pred_check
        %p227 = pneg %p226
      $region38: #{tpu_custom_call.1} parent=17 // pred_check_branch
        %229 = sbr.rel (%p227) target = $region40
      $region39: #{tpu_custom_call.1} parent=17 // pred_region
        %s230 = sadd.s32 %s180, 4
        %s231 = scalar_lea.vmem [#allocation5], %s230
        %v232 = vld [vmem:[%s231] sm:$0x1]
        %s233 = scalar_lea.vmem [#allocation8], %s225
        %234 = vst [vmem:[%s233] sm:$0x1] %v232
      $region40: #{tpu_custom_call.1} parent=17 // pred_fallthru
        _
      %s235 = sadd.s32 %s181, 5
      %s236 = sld [smem:[#allocation4 + %s235]]
      %p237 = scmp.lt.s32.totalorder %s236, 1024
      // Predicated region
      $region41: #{tpu_custom_call.1} parent=17 // pred_check
        %p238 = pneg %p237
      $region42: #{tpu_custom_call.1} parent=17 // pred_check_branch
        %240 = sbr.rel (%p238) target = $region44
      $region43: #{tpu_custom_call.1} parent=17 // pred_region
        %s241 = sadd.s32 %s180, 5
        %s242 = scalar_lea.vmem [#allocation5], %s241
        %v243 = vld [vmem:[%s242] sm:$0x1]
        %s244 = scalar_lea.vmem [#allocation8], %s236
        %245 = vst [vmem:[%s244] sm:$0x1] %v243
      $region44: #{tpu_custom_call.1} parent=17 // pred_fallthru
        _
      %s246 = sadd.s32 %s181, 6
      %s247 = sld [smem:[#allocation4 + %s246]]
      %p248 = scmp.lt.s32.totalorder %s247, 1024
      // Predicated region
      $region45: #{tpu_custom_call.1} parent=17 // pred_check
        %p249 = pneg %p248
      $region46: #{tpu_custom_call.1} parent=17 // pred_check_branch
        %251 = sbr.rel (%p249) target = $region48
      $region47: #{tpu_custom_call.1} parent=17 // pred_region
        %s252 = sadd.s32 %s180, 6
        %s253 = scalar_lea.vmem [#allocation5], %s252
        %v254 = vld [vmem:[%s253] sm:$0x1]
        %s255 = scalar_lea.vmem [#allocation8], %s247
        %256 = vst [vmem:[%s255] sm:$0x1] %v254
      $region48: #{tpu_custom_call.1} parent=17 // pred_fallthru
        _
      %s257 = sadd.s32 %s181, 7
      %s258 = sld [smem:[#allocation4 + %s257]]
      %p259 = scmp.lt.s32.totalorder %s258, 1024
      // Predicated region
      $region49: #{tpu_custom_call.1} parent=17 // pred_check
        %p260 = pneg %p259
      $region50: #{tpu_custom_call.1} parent=17 // pred_check_branch
        %262 = sbr.rel (%p260) target = $region52
      $region51: #{tpu_custom_call.1} parent=17 // pred_region
        %s263 = sadd.s32 %s180, 7
        %s264 = scalar_lea.vmem [#allocation5], %s263
        %v265 = vld [vmem:[%s264] sm:$0x1]
        %s266 = scalar_lea.vmem [#allocation8], %s258
        %267 = vst [vmem:[%s266] sm:$0x1] %v265
      $region52: #{tpu_custom_call.1} parent=17 // pred_fallthru
        _
    $region18: #{tpu_custom_call.1} parent=1 // loop_footer
      %s179 = sadd.s32 1, %s175
    $region19: #{tpu_custom_call.1} parent=1 // loop_footer_branch
      %174 = sbr.rel target = $region15
    $region20: #{tpu_custom_call.1} parent=1 // loop_exit
      _
    // Predicated region
    $region53: #{tpu_custom_call.1} parent=1 // pred_check
      _
    $region54: #{tpu_custom_call.1} parent=1 // pred_check_branch
      %269 = sbr.rel (0) target = $region56
    $region55: #{tpu_custom_call.1} parent=1 // pred_region
      %s270 = sld [smem:[#allocation3]]
      %s271 = smul.u32 128, %s270
      %s273 = ssub.s32 16384, 16384
      %274 = vsyncadd [#allocation7], %s273
      %s275 = smul.addr %s271, 128
      %s276 = scalar_lea.hbm %s3, %s275
      %s277 = sshll.u32 [#allocation8], 4
      %s278 = int_to_ptr.vmem [resolvable:$true] %s277
      %283 = dma.vmem_to_hbm [thread:$0]  %s278, 16384, %s276, [#allocation7], 128, 128, 8
    $region56: #{tpu_custom_call.1} parent=1 // pred_fallthru
      _
    // Predicated region
    $region57: #{tpu_custom_call.1} parent=1 // pred_check
      _
    $region58: #{tpu_custom_call.1} parent=1 // pred_check_branch
      %285 = sbr.rel (0) target = $region60
    $region59: #{tpu_custom_call.1} parent=1 // pred_region
      %286 = dma.done [#allocation7], 16384
    $region60: #{tpu_custom_call.1} parent=1 // pred_fallthru
      _
    %287 = vsyncpa [#allocation6], 1
    %288 = vsyncpa [#allocation7], 1

</llo_original>
